<compile_context>
chip_gen: v6e
topology: v6e:2x2x1
jax: 0.10.0
libtpu: 0.0.40
codegen_flags: <defaults>
</compile_context>

<pallas_src>
import functools

import jax
import jax.numpy as jnp
from jax import lax
from jax.experimental import pallas as pl
from jax.experimental.pallas import tpu as pltpu


def _round_up(a, b):
    return (a + b - 1) // b * b


def _vmem_working_set(tm, tn, D, itx, w_bufs):
    return (2 * tm * D * itx          # x tile (double-buffered)
            + 2 * tm * tn * itx       # out tile (double-buffered)
            + w_bufs * D * tn * 2     # bf16 W column blocks
            + tm * D * 2              # bf16 LN scratch
            + 8 * D * itx)            # gamma / beta / bias tiles


def _pick_tn(D, tile_n):
    """Largest multiple of 128 that divides D and is <= tile_n (else full D)."""
    if D % 128 != 0:
        return D
    cand = max(128, min((tile_n // 128) * 128, D))
    while cand > 128 and D % cand != 0:
        cand -= 128
    return cand


def _pick_tm(M, tile_m, D, tn, itx, budget, w_bufs):
    if M <= 128:
        return _round_up(M, 8)
    tm = max(128, min((tile_m // 128) * 128, _round_up(M, 128)))
    # Guarantee at least 2 token tiles (v7x megacore gets both cores busy).
    while tm > 128 and _round_up(M, tm) // tm < 2:
        tm -= 128
    # Shrink until the tile working set fits the VMEM budget.
    while tm > 128 and _vmem_working_set(tm, tn, D, itx, w_bufs) > budget:
        tm -= 128
    return tm


def _prenormdrop_kernel(seed_ref,            # scalar-prefetch (SMEM): int32[1]
                        x_ref,               # (TM, D)   input tokens
                        gamma_ref,           # (1, D)    LayerNorm weight
                        beta_ref,            # (1, D)    LayerNorm bias
                        w_ref,               # (D, TN)   fn (Linear) weight, bf16
                        b_ref,               # (1, TN)   fn (Linear) bias
                        o_ref,               # (TM, TN)  output
                        xn_ref,              # (TM, D)   bf16 VMEM scratch (LN result)
                        *, eps, drop_p, total_cols, use_hw_prng):
    i = pl.program_id(0)
    j = pl.program_id(1)

    # ---- LayerNorm over the last dim, computed once per token tile ----
    # (valid because j is the innermost grid axis and the x block index is
    #  i-only, so xn_ref persists across the column sweep)
    @pl.when(j == 0)
    def _():
        x = x_ref[...].astype(jnp.float32)
        mean = jnp.mean(x, axis=-1, keepdims=True)
        centered = x - mean
        var = jnp.mean(centered * centered, axis=-1, keepdims=True)
        xn = centered * lax.rsqrt(var + eps)
        xn = xn * gamma_ref[...].astype(jnp.float32) + beta_ref[...].astype(jnp.float32)
        xn_ref[...] = xn.astype(xn_ref.dtype)          # bf16 for the MXU

    # ---- fn: dense projection (bf16 MXU matmul, f32 accumulate) ----
    y = jnp.dot(xn_ref[...], w_ref[...], preferred_element_type=jnp.float32)
    y = y + b_ref[...].astype(jnp.float32)

    # ---- Dropout (training semantics: drop w/ prob p, scale by 1/(1-p)) ----
    if drop_p > 0.0:
        tm, tn = y.shape
        thr = jnp.uint32(min(int(round(drop_p * (2 ** 32))), 2 ** 32 - 1))
        if use_hw_prng:
            # Hardware PRNG: ~1 op/vreg, keeps the kernel MXU-bound.
            pltpu.prng_seed(seed_ref[0], i, j)
            bits = pltpu.prng_random_bits((tm, tn))
            if bits.dtype != jnp.uint32:
                bits = pltpu.bitcast(bits, jnp.uint32)
            keep = bits >= thr
        else:
            # Fallback: stateless counter-based hash. Index math folded:
            # grid-invariant (row*D + col) plus a scalar per-tile offset.
            row = lax.broadcasted_iota(jnp.int32, (tm, tn), 0)
            col = lax.broadcasted_iota(jnp.int32, (tm, tn), 1)
            local = row * total_cols + col
            off = i * (tm * total_cols) + j * tn        # scalar ALU
            h = (local + off).astype(jnp.uint32) ^ seed_ref[0].astype(jnp.uint32)
            h = h ^ (h >> jnp.uint32(16))
            h = h * jnp.uint32(0x7FEB352D)
            h = h ^ (h >> jnp.uint32(15))
            h = h * jnp.uint32(0x846CA68B)
            h = h ^ (h >> jnp.uint32(16))
            keep = h >= thr
        y = jnp.where(keep, y * jnp.float32(1.0 / (1.0 - drop_p)), jnp.float32(0.0))

    o_ref[...] = y.astype(o_ref.dtype)


def prenormdrop(x, gamma, beta, w, b, *, drop_p=0.1, eps=1e-5, seed=0,
                tile_m=512, tile_n=512):
    """x: (B, N, D).  Returns dropout(LayerNorm(x) @ w + b), shape (B, N, D).

    Pass `w` already cast to bf16 (cast once at init) to avoid an extra HBM
    pass per call; f32 weights are accepted and cast here as a fallback.
    """
    assert 0.0 <= drop_p < 1.0, "drop_p must be in [0, 1)"
    B, N, D = x.shape
    M = B * N
    itx = x.dtype.itemsize

    # VMEM budget with ~25% headroom for compiler internal scratch
    # (≈48 MiB on v7x, ≈96 MiB on v5e/v6e).
    try:
        vmem_cap = int(pltpu.get_tpu_info().vmem_capacity_bytes)
    except Exception:
        vmem_cap = 64 << 20
    budget = int(0.75 * vmem_cap)

    tn = _pick_tn(D, tile_n)
    ncols = D // tn
    w_bufs = 3 if ncols >= 3 else 2
    tm = _pick_tm(M, tile_m, D, tn, itx, budget, w_bufs)
    M_pad = _round_up(M, tm)

    x2 = x.reshape(M, D)
    if M_pad != M:
        x2 = jnp.pad(x2, ((0, M_pad - M), (0, 0)))
    gamma2 = gamma.reshape(1, D)
    beta2 = beta.reshape(1, D)
    w_bf = w if w.dtype == jnp.bfloat16 else w.astype(jnp.bfloat16)
    b2 = b.reshape(1, D)
    seed_arr = jnp.array([seed], dtype=jnp.int32)

    ws = _vmem_working_set(tm, tn, D, itx, w_bufs)
    vmem_limit = int(min(budget, max(32 << 20, int(1.5 * ws))))

    # Deeper buffering on the W column stream only when there are enough
    # column blocks for it to matter.
    if ncols >= 3:
        w_spec = pl.BlockSpec((D, tn), lambda i, j, s: (0, j),
                              pipeline_mode=pl.Buffered(3))
    else:
        w_spec = pl.BlockSpec((D, tn), lambda i, j, s: (0, j))

    cost = pl.CostEstimate(
        flops=2 * M_pad * D * D,
        transcendentals=M_pad,                               # rsqrt per token
        bytes_accessed=(2 * M_pad * D * itx                  # x in + out
                        + (M_pad // tm) * D * D * 2))        # W re-stream (bf16)

    def build(use_hw_prng):
        kernel = functools.partial(_prenormdrop_kernel, eps=eps,
                                   drop_p=float(drop_p), total_cols=D,
                                   use_hw_prng=use_hw_prng)
        return pl.pallas_call(
            kernel,
            out_shape=jax.ShapeDtypeStruct((M_pad, D), x.dtype),
            grid_spec=pltpu.PrefetchScalarGridSpec(
                num_scalar_prefetch=1,
                grid=(M_pad // tm, ncols),
                in_specs=[
                    pl.BlockSpec((tm, D), lambda i, j, s: (i, 0)),   # x tile
                    pl.BlockSpec((1, D),  lambda i, j, s: (0, 0)),   # gamma
                    pl.BlockSpec((1, D),  lambda i, j, s: (0, 0)),   # beta
                    w_spec,                                          # W column block
                    pl.BlockSpec((1, tn), lambda i, j, s: (0, j)),   # bias block
                ],
                out_specs=pl.BlockSpec((tm, tn), lambda i, j, s: (i, j)),
                scratch_shapes=[pltpu.VMEM((tm, D), jnp.bfloat16)],
            ),
            compiler_params=pltpu.CompilerParams(
                dimension_semantics=("parallel", "arbitrary"),
                vmem_limit_bytes=vmem_limit),
            cost_estimate=cost,
        )

    args = (seed_arr, x2, gamma2, beta2, w_bf, b2)
    if drop_p > 0.0:
        try:
            out2 = jax.block_until_ready(build(True)(*args))
        except Exception:
            # TODO(synk): hardware PRNG unavailable (e.g. interpret/CPU mode);
            # fall back to the stateless integer-hash dropout path.
            out2 = jax.block_until_ready(build(False)(*args))
    else:
        out2 = jax.block_until_ready(build(True)(*args))

    return out2[:M].reshape(B, N, D)


def _ref_forward(x, gamma, beta, w, b, eps=1e-5):
    xf = x.astype(jnp.float32)
    mean = xf.mean(-1, keepdims=True)
    var = ((xf - mean) ** 2).mean(-1, keepdims=True)
    xn = (xf - mean) * lax.rsqrt(var + eps) * gamma + beta
    return jnp.einsum("bnd,de->bne", xn, w) + b


if __name__ == "__main__":
    drop_p = 0.1
    key = jax.random.PRNGKey(0)
    kx, kw, kb, kx2, kw2, kb2 = jax.random.split(key, 6)

    # --- case 1: small transformer-ish shapes (B=2, N=8, D=128) ---
    B, N, D = 2, 8, 128
    x = jax.random.normal(kx, (B, N, D), dtype=jnp.float32)
    gamma = jnp.ones((D,), dtype=jnp.float32)       # LayerNorm weight
    beta = jnp.zeros((D,), dtype=jnp.float32)       # LayerNorm bias
    w = jax.random.normal(kw, (D, D), dtype=jnp.float32) * (1.0 / jnp.sqrt(D))
    b = jax.random.normal(kb, (D,), dtype=jnp.float32) * 0.02
    w_bf = w.astype(jnp.bfloat16)                   # cast once (hoisted out of hot path)

    # correctness with dropout disabled
    out_nodrop = prenormdrop(x, gamma, beta, w_bf, b, drop_p=0.0, seed=0)
    jax.block_until_ready(out_nodrop)
    err = float(jnp.max(jnp.abs(out_nodrop - _ref_forward(x, gamma, beta, w, b))))
    assert err < 0.25, f"matmul/LN mismatch (case 1), max_err={err}"

    # main run with dropout
    out = prenormdrop(x, gamma, beta, w_bf, b, drop_p=drop_p, seed=1234)
    jax.block_until_ready(out)
    assert out.shape == (B, N, D) and out.dtype == x.dtype
    total = B * N * D
    n_zero = int(jnp.sum(out == 0.0))
    assert int(0.02 * total) <= n_zero <= int(0.25 * total), (
        f"dropout rate looks wrong: {n_zero}/{total} zeros")

    # --- case 2: exercises multi-tile token grid + W column blocking ---
    B2, N2, D2 = 2, 256, 256
    x_big = jax.random.normal(kx2, (B2, N2, D2), dtype=jnp.float32)
    gamma_big = jnp.ones((D2,), dtype=jnp.float32)
    beta_big = jnp.zeros((D2,), dtype=jnp.float32)
    w_big = jax.random.normal(kw2, (D2, D2), dtype=jnp.float32) * (1.0 / jnp.sqrt(D2))
    b_big = jax.random.normal(kb2, (D2,), dtype=jnp.float32) * 0.02
    out_big = prenormdrop(x_big, gamma_big, beta_big, w_big.astype(jnp.bfloat16),
                          b_big, drop_p=0.0, tile_m=256, tile_n=128)
    jax.block_until_ready(out_big)
    err2 = float(jnp.max(jnp.abs(out_big - _ref_forward(x_big, gamma_big, beta_big,
                                                        w_big, b_big))))
    assert err2 < 0.25, f"matmul/LN mismatch (case 2), max_err={err2}"

    print("KERNEL_OK")
</pallas_src>

<mosaic_0001>
module attributes {stable_mosaic.version = 11 : i64} {
  func.func @_prenormdrop_kernel(%arg0: i32, %arg1: i32, %arg2: memref<1xi32, #tpu.memory_space<smem>>, %arg3: memref<16x128xf32, #tpu.memory_space<vmem>>, %arg4: memref<1x128xf32, #tpu.memory_space<vmem>>, %arg5: memref<1x128xf32, #tpu.memory_space<vmem>>, %arg6: memref<128x128xbf16, #tpu.memory_space<vmem>>, %arg7: memref<1x128xf32, #tpu.memory_space<vmem>>, %arg8: memref<16x128xf32, #tpu.memory_space<vmem>>, %arg9: memref<16x128xbf16, #tpu.memory_space<vmem>>) attributes {dimension_semantics = [#tpu.dimension_semantics<parallel>, #tpu.dimension_semantics<arbitrary>], iteration_bounds = array<i64: 1, 1>, scalar_prefetch = 1 : i64, scratch_operands = 1 : i64, tpu.core_type = #tpu.core_type<tc>, window_params = [{transform_indices = @transform_0, window_bounds = array<i64: 16, 128>}, {pipeline_mode = #tpu.pipeline_mode<synchronous>, transform_indices = @transform_1, window_bounds = array<i64: 1, 128>}, {pipeline_mode = #tpu.pipeline_mode<synchronous>, transform_indices = @transform_2, window_bounds = array<i64: 1, 128>}, {transform_indices = @transform_3, window_bounds = array<i64: 128, 128>}, {transform_indices = @transform_4, window_bounds = array<i64: 1, 128>}, {transform_indices = @transform_5, window_bounds = array<i64: 16, 128>}]} {
    %c0_i32 = arith.constant 0 : i32
    %0 = arith.cmpi eq, %arg1, %c0_i32 : i32
    %1 = arith.extui %0 : i1 to i32
    %c0_i32_0 = arith.constant 0 : i32
    %2 = arith.cmpi ne, %1, %c0_i32_0 : i32
    scf.if %2 {
      %c0_8 = arith.constant 0 : index
      %c0_9 = arith.constant 0 : index
      %10 = vector.load %arg3[%c0_8, %c0_9] : memref<16x128xf32, #tpu.memory_space<vmem>>, vector<16x128xf32>
      %cst_10 = arith.constant dense<0.000000e+00> : vector<16xf32>
      %11 = vector.multi_reduction <add>, %10, %cst_10 [1] : vector<16x128xf32> to vector<16xf32>
      %12 = vector.shape_cast %11 : vector<16xf32> to vector<16x1xf32>
      %cst_11 = arith.constant 1.280000e+02 : f32
      %13 = vector.broadcast %cst_11 : f32 to vector<16x1xf32>
      %14 = arith.divf %12, %13 : vector<16x1xf32>
      %15 = vector.broadcast %14 : vector<16x1xf32> to vector<16x128xf32>
      %16 = arith.subf %10, %15 : vector<16x128xf32>
      %17 = arith.mulf %16, %16 : vector<16x128xf32>
      %cst_12 = arith.constant dense<0.000000e+00> : vector<16xf32>
      %18 = vector.multi_reduction <add>, %17, %cst_12 [1] : vector<16x128xf32> to vector<16xf32>
      %19 = vector.shape_cast %18 : vector<16xf32> to vector<16x1xf32>
      %cst_13 = arith.constant 1.280000e+02 : f32
      %20 = vector.broadcast %cst_13 : f32 to vector<16x1xf32>
      %21 = arith.divf %19, %20 : vector<16x1xf32>
      %cst_14 = arith.constant 9.99999974E-6 : f32
      %22 = vector.broadcast %cst_14 : f32 to vector<16x1xf32>
      %23 = arith.addf %21, %22 : vector<16x1xf32>
      %24 = math.rsqrt %23 : vector<16x1xf32>
      %25 = vector.broadcast %24 : vector<16x1xf32> to vector<16x128xf32>
      %26 = arith.mulf %16, %25 : vector<16x128xf32>
      %c0_15 = arith.constant 0 : index
      %c0_16 = arith.constant 0 : index
      %27 = vector.load %arg4[%c0_15, %c0_16] : memref<1x128xf32, #tpu.memory_space<vmem>>, vector<1x128xf32>
      %28 = vector.broadcast %27 : vector<1x128xf32> to vector<16x128xf32>
      %29 = arith.mulf %26, %28 : vector<16x128xf32>
      %c0_17 = arith.constant 0 : index
      %c0_18 = arith.constant 0 : index
      %30 = vector.load %arg5[%c0_17, %c0_18] : memref<1x128xf32, #tpu.memory_space<vmem>>, vector<1x128xf32>
      %31 = vector.broadcast %30 : vector<1x128xf32> to vector<16x128xf32>
      %32 = arith.addf %29, %31 : vector<16x128xf32>
      %33 = arith.truncf %32 : vector<16x128xf32> to vector<16x128xbf16>
      %c0_19 = arith.constant 0 : index
      %c0_20 = arith.constant 0 : index
      %34 = vector.load %arg9[%c0_19, %c0_20] : memref<16x128xbf16, #tpu.memory_space<vmem>>, vector<16x128xbf16>
      tpu.vector_store %arg9[%c0_19, %c0_20], %33 {strides = array<i32>} : memref<16x128xbf16, #tpu.memory_space<vmem>>, vector<16x128xbf16>,
    } else {
    }
    %c0 = arith.constant 0 : index
    %c0_1 = arith.constant 0 : index
    %3 = vector.load %arg9[%c0, %c0_1] : memref<16x128xbf16, #tpu.memory_space<vmem>>, vector<16x128xbf16>
    %c0_2 = arith.constant 0 : index
    %c0_3 = arith.constant 0 : index
    %4 = vector.load %arg6[%c0_2, %c0_3] : memref<128x128xbf16, #tpu.memory_space<vmem>>, vector<128x128xbf16>
    %cst = arith.constant dense<0.000000e+00> : vector<16x128xf32>
    %5 = tpu.matmul %3, %4, %cst {dimension_numbers = #tpu.dot_dimension_numbers<[1], [0], [0], [1], [0, 0, 1, 1], [], []>} : vector<16x128xbf16>, vector<128x128xbf16>, vector<16x128xf32> -> vector<16x128xf32>
    %c0_4 = arith.constant 0 : index
    %c0_5 = arith.constant 0 : index
    %6 = vector.load %arg7[%c0_4, %c0_5] : memref<1x128xf32, #tpu.memory_space<vmem>>, vector<1x128xf32>
    %7 = vector.broadcast %6 : vector<1x128xf32> to vector<16x128xf32>
    %8 = arith.addf %5, %7 : vector<16x128xf32>
    %c0_6 = arith.constant 0 : index
    %c0_7 = arith.constant 0 : index
    %9 = vector.load %arg8[%c0_6, %c0_7] : memref<16x128xf32, #tpu.memory_space<vmem>>, vector<16x128xf32>
    tpu.vector_store %arg8[%c0_6, %c0_7], %8 {strides = array<i32>} : memref<16x128xf32, #tpu.memory_space<vmem>>, vector<16x128xf32>,
    return
  }
  func.func @transform_0(%arg0: i32, %arg1: i32, %arg2: memref<1xi32, #tpu.memory_space<smem>>) -> (i32, i32) {
    %c0_i32 = arith.constant 0 : i32
    %c0_i32_0 = arith.constant 0 : i32
    return %arg0, %c0_i32 : i32, i32
  }
  func.func @transform_1(%arg0: i32, %arg1: i32, %arg2: memref<1xi32, #tpu.memory_space<smem>>) -> (i32, i32) {
    %c0_i32 = arith.constant 0 : i32
    %c0_i32_0 = arith.constant 0 : i32
    %c0_i32_1 = arith.constant 0 : i32
    return %c0_i32, %c0_i32_0 : i32, i32
  }
  func.func @transform_2(%arg0: i32, %arg1: i32, %arg2: memref<1xi32, #tpu.memory_space<smem>>) -> (i32, i32) {
    %c0_i32 = arith.constant 0 : i32
    %c0_i32_0 = arith.constant 0 : i32
    %c0_i32_1 = arith.constant 0 : i32
    return %c0_i32, %c0_i32_0 : i32, i32
  }
  func.func @transform_3(%arg0: i32, %arg1: i32, %arg2: memref<1xi32, #tpu.memory_space<smem>>) -> (i32, i32) {
    %c0_i32 = arith.constant 0 : i32
    %c0_i32_0 = arith.constant 0 : i32
    return %c0_i32, %arg1 : i32, i32
  }
  func.func @transform_4(%arg0: i32, %arg1: i32, %arg2: memref<1xi32, #tpu.memory_space<smem>>) -> (i32, i32) {
    %c0_i32 = arith.constant 0 : i32
    %c0_i32_0 = arith.constant 0 : i32
    return %c0_i32, %arg1 : i32, i32
  }
  func.func @transform_5(%arg0: i32, %arg1: i32, %arg2: memref<1xi32, #tpu.memory_space<smem>>) -> (i32, i32) {
    %c0_i32 = arith.constant 0 : i32
    return %arg0, %arg1 : i32, i32
  }
}

</mosaic_0001>

<llo_original>
// kernel: tpu_custom_call.1
$region0: #{tpu_custom_call.1}
  #allocation0 [shape = 'u32[]', space=smem, size = 0x4, offset = 0x4, fixed_abs, tag = 'smem constant byte address 0x4 - core index']
  #allocation1 [shape = 'u32[144,128]{1,0:T(1,128)}', space=vmem, size = 0x12000, scoped, tag = 'internal scratch']
  #allocation2 [shape = 'bf16[16,128]{1,0:T(8,128)(2,1)}', space=vmem, size = 0x1000, scoped, tag = 'scratch operand']
  #allocation3 [shape = 's32[1]{0}', space=sflag, size = 0x4, scoped, tag = 'scoped memory for tpu_custom_call.1']
  #allocation4 [shape = 's32[1]{0:T(128)S(6)}', space=smem, size = 0x200, scoped, tag = 'prefetched SMEM operand 0']
  %s0 = inlined_call_operand.<no memory space> [shape: s32[1], index: 0, kind: input, shape index: {}]
  %s1 = inlined_call_operand.hbm [shape: f32[16,128], index: 1, kind: input, shape index: {}]
  %s2 = inlined_call_operand.vmem [shape: f32[1,128], index: 2, kind: input, shape index: {}]
  %s3 = inlined_call_operand.vmem [shape: f32[1,128], index: 3, kind: input, shape index: {}]
  %s4 = inlined_call_operand.hbm [shape: bf16[128,128], index: 4, kind: input, shape index: {}]
  %s5 = inlined_call_operand.vmem [shape: f32[1,128], index: 5, kind: input, shape index: {}]
  %s6 = inlined_call_operand.hbm [shape: f32[16,128], index: 6, kind: output, shape index: {}]
  %s7 = sld [smem:[#allocation0]]
  $region42: #{tpu_custom_call.1} parent=0
    _
  %s9 = ssub.s32 1, %s7
  %s10 = scalar_select 0, %s9, %s7
  %11 = sst [smem:[#allocation4]] %s0
  $region1: #{tpu_custom_call.1} parent=0
    #allocation5 [shape = 'u8[8192]{0}', space=vmem, size = 0x2000, scoped, tag = 'input window, operand 1, single buffered']
    #allocation6 [shape = 's32[1]{0}', space=sflag, size = 0x4, scoped, tag = 'scoped memory for tpu_custom_call.1']
    #allocation7 [shape = 's32[1]{0}', space=sflag, size = 0x4, scoped, tag = 'scoped memory for tpu_custom_call.1']
    #allocation8 [shape = 'u8[32768]{0}', space=vmem, size = 0x8000, scoped, tag = 'input window, operand 4, single buffered']
    #allocation9 [shape = 's32[1]{0}', space=sflag, size = 0x4, scoped, tag = 'scoped memory for tpu_custom_call.1']
    #allocation10 [shape = 'u8[8192]{0}', space=vmem, size = 0x2000, scoped, tag = 'output window, operand 0, single buffered']
    %12 = vsyncpa [#allocation6], 0
    %13 = vsyncpa [#allocation9], 0
    %14 = vsyncpa [#allocation7], 0
    // Predicated region
    $region2: #{tpu_custom_call.1} parent=1 // pred_check
      _
    $region3: #{tpu_custom_call.1} parent=1 // pred_check_branch
      %16 = sbr.rel (0) target = $region5
    $region4: #{tpu_custom_call.1} parent=1 // pred_region
      %s18 = ssub.s32 256, 256
      %19 = vsyncadd [#allocation6], %s18
      %s20 = sshll.u32 [#allocation5], 4
      %s21 = int_to_ptr.vmem [resolvable:$true] %s20
      %26 = dma.hbm_to_vmem [thread:$0]  %s1, 256, %s21, [#allocation6], 128, 128, 8
    $region5: #{tpu_custom_call.1} parent=1 // pred_fallthru
      _
    // Predicated region
    $region6: #{tpu_custom_call.1} parent=1 // pred_check
      _
    $region7: #{tpu_custom_call.1} parent=1 // pred_check_branch
      %28 = sbr.rel (0) target = $region9
    $region8: #{tpu_custom_call.1} parent=1 // pred_region
      _
    $region9: #{tpu_custom_call.1} parent=1 // pred_fallthru
      _
    // Predicated region
    $region10: #{tpu_custom_call.1} parent=1 // pred_check
      _
    $region11: #{tpu_custom_call.1} parent=1 // pred_check_branch
      %30 = sbr.rel (0) target = $region13
    $region12: #{tpu_custom_call.1} parent=1 // pred_region
      _
    $region13: #{tpu_custom_call.1} parent=1 // pred_fallthru
      _
    // Predicated region
    $region14: #{tpu_custom_call.1} parent=1 // pred_check
      _
    $region15: #{tpu_custom_call.1} parent=1 // pred_check_branch
      %32 = sbr.rel (0) target = $region17
    $region16: #{tpu_custom_call.1} parent=1 // pred_region
      %s34 = ssub.s32 1024, 1024
      %35 = vsyncadd [#allocation9], %s34
      %s36 = sshll.u32 [#allocation8], 4
      %s37 = int_to_ptr.vmem [resolvable:$true] %s36
      %42 = dma.hbm_to_vmem [thread:$0]  %s4, 1024, %s37, [#allocation9], 64, 64, 4
    $region17: #{tpu_custom_call.1} parent=1 // pred_fallthru
      _
    // Predicated region
    $region18: #{tpu_custom_call.1} parent=1 // pred_check
      _
    $region19: #{tpu_custom_call.1} parent=1 // pred_check_branch
      %44 = sbr.rel (0) target = $region21
    $region20: #{tpu_custom_call.1} parent=1 // pred_region
      _
    $region21: #{tpu_custom_call.1} parent=1 // pred_fallthru
      _
    // Predicated region
    $region22: #{tpu_custom_call.1} parent=1 // pred_check
      _
    $region23: #{tpu_custom_call.1} parent=1 // pred_check_branch
      %46 = sbr.rel (0) target = $region25
    $region24: #{tpu_custom_call.1} parent=1 // pred_region
      %47 = dma.done [#allocation6], 256
    $region25: #{tpu_custom_call.1} parent=1 // pred_fallthru
      _
    // Predicated region
    $region26: #{tpu_custom_call.1} parent=1 // pred_check
      _
    $region27: #{tpu_custom_call.1} parent=1 // pred_check_branch
      %49 = sbr.rel (0) target = $region29
    $region28: #{tpu_custom_call.1} parent=1 // pred_region
      %50 = dma.done [#allocation9], 1024
    $region29: #{tpu_custom_call.1} parent=1 // pred_fallthru
      _
    %p52 = scmp.eq.s32.totalorder 0, 0
    // Predicated region
    $region30: #{tpu_custom_call.1} parent=1 // pred_check
      %p53 = pneg %p52
    $region31: #{tpu_custom_call.1} parent=1 // pred_check_branch
      %55 = sbr.rel (%p53) target = $region33
    $region32: #{tpu_custom_call.1} parent=1 // pred_region
      %v56 = vld [vmem:[#allocation5] sm:$0xff]
      %v57 = vld [vmem:[#allocation5 + $0x8] sm:$0xff]
      %58 = vadd.xlane.f32.xlu0 %v56
      %v59 = vpop.xlane.xlu0 %58
      %60 = vadd.xlane.f32.xlu0 %v57
      %v61 = vpop.xlane.xlu0 %60
      %v62 = vrcp.pop 128.0
      %v63 = vmul.f32 %v59, %v62
      %v64 = vmul.f32 %v61, %v62
      %v65 = vsub.f32 %v56, %v63
      %v66 = vsub.f32 %v57, %v64
      %v67 = vmul.f32 %v65, %v65
      %v68 = vmul.f32 %v66, %v66
      %69 = vadd.xlane.f32.xlu0 %v67
      %v70 = vpop.xlane.xlu0 %69
      %71 = vadd.xlane.f32.xlu0 %v68
      %v72 = vpop.xlane.xlu0 %71
      %v73 = vmul.f32 %v70, %v62
      %v74 = vmul.f32 %v72, %v62
      %v75 = vadd.f32 %v73, 1e-05
      %v76 = vadd.f32 %v74, 1e-05
      %v77 = vrsqrt.pop %v75
      %v78 = vrsqrt.pop %v76
      %v79 = vmul.f32 %v65, %v77
      %v80 = vmul.f32 %v66, %v78
      %v81 = vld [vmem:[%s2] sm:$0x1]
      %v83 = vlaneseq
      %v84 = vshrl.u32 %v83, 7
      %v85 = vsub.s32 0, %v84
      %v86 = vrot.slane %v81, %v85
      %v88 = vmul.f32 %v79, %v86
      %v89 = vmul.f32 %v80, %v86
      %v90 = vld [vmem:[%s3] sm:$0x1]
      %v92 = vlaneseq
      %v93 = vshrl.u32 %v92, 7
      %v94 = vsub.s32 0, %v93
      %v95 = vrot.slane %v90, %v94
      %v97 = vadd.f32 %v88, %v95
      %v98 = vadd.f32 %v89, %v95
      %v99 = vpack.c.bf16 %v98, %v97
      %v101 = vunpack.c.l.b16 %v99
      %v102 = vunpack.c.h.b16 %v99
      %v103 = vpack.c.b16 %v101, %v101
      %v104 = vpack.c.b16 %v102, %v102
      %107 = vst [vmem:[#allocation2] sm:$0xf] %v103
      %108 = vst [vmem:[#allocation2 + $0x4] sm:$0xf] %v104
    $region33: #{tpu_custom_call.1} parent=1 // pred_fallthru
      _
    %v109 = vld [vmem:[#allocation2] sm:$0xf]
    %v110 = vld [vmem:[#allocation2 + $0x4] sm:$0xf]
    %v111 = vld [vmem:[#allocation8] sm:$0xf]
    %v112 = vld [vmem:[#allocation8 + $0x4] sm:$0xf]
    %v113 = vld [vmem:[#allocation8 + $0x8] sm:$0xf]
    %v114 = vld [vmem:[#allocation8 + $0xc] sm:$0xf]
    %v115 = vld [vmem:[#allocation8 + $0x10] sm:$0xf]
    %v116 = vld [vmem:[#allocation8 + $0x14] sm:$0xf]
    %v117 = vld [vmem:[#allocation8 + $0x18] sm:$0xf]
    %v118 = vld [vmem:[#allocation8 + $0x1c] sm:$0xf]
    %v119 = vld [vmem:[#allocation8 + $0x20] sm:$0xf]
    %v120 = vld [vmem:[#allocation8 + $0x24] sm:$0xf]
    %v121 = vld [vmem:[#allocation8 + $0x28] sm:$0xf]
    %v122 = vld [vmem:[#allocation8 + $0x2c] sm:$0xf]
    %v123 = vld [vmem:[#allocation8 + $0x30] sm:$0xf]
    %v124 = vld [vmem:[#allocation8 + $0x34] sm:$0xf]
    %v125 = vld [vmem:[#allocation8 + $0x38] sm:$0xf]
    %v126 = vld [vmem:[#allocation8 + $0x3c] sm:$0xf]
    %v127 = vld [vmem:[%s5] sm:$0x1]
    %v129 = vlaneseq
    %v130 = vshrl.u32 %v129, 7
    %v131 = vsub.s32 0, %v130
    %v132 = vrot.slane %v127, %v131
    %v136 = vunpack.c.l.b16 %v109
    %v137 = vunpack.c.l.b16 %v110
    %v138 = vpack.c.b16 %v137, %v136
    %v156 = vunpack.c.l.b16 %v111
    %v157 = vunpack.c.l.b16 %v112
    %v158 = vunpack.c.l.b16 %v113
    %v159 = vunpack.c.l.b16 %v114
    %v160 = vunpack.c.l.b16 %v115
    %v161 = vunpack.c.l.b16 %v116
    %v162 = vunpack.c.l.b16 %v117
    %v163 = vunpack.c.l.b16 %v118
    %v164 = vunpack.c.l.b16 %v119
    %v165 = vunpack.c.l.b16 %v120
    %v166 = vunpack.c.l.b16 %v121
    %v167 = vunpack.c.l.b16 %v122
    %v168 = vunpack.c.l.b16 %v123
    %v169 = vunpack.c.l.b16 %v124
    %v170 = vunpack.c.l.b16 %v125
    %v171 = vunpack.c.l.b16 %v126
    %v172 = vpack.c.b16 %v157, %v156
    %v173 = vpack.c.b16 %v159, %v158
    %v174 = vpack.c.b16 %v161, %v160
    %v175 = vpack.c.b16 %v163, %v162
    %v176 = vpack.c.b16 %v165, %v164
    %v177 = vpack.c.b16 %v167, %v166
    %v178 = vpack.c.b16 %v169, %v168
    %v179 = vpack.c.b16 %v171, %v170
    %188 = vmatprep.subr.bf16.mxu0 0
    %189 = vmatpush1.bf16.msra.mxu0 %v179
    %190 = vmatprep.subr.bf16.mxu0 0
    %191 = vmatpush1.bf16.msra.mxu0 %v178
    %192 = vmatprep.subr.bf16.mxu0 0
    %193 = vmatpush1.bf16.msra.mxu0 %v177
    %194 = vmatprep.subr.bf16.mxu0 0
    %195 = vmatpush1.bf16.msra.mxu0 %v176
    %196 = vmatprep.subr.bf16.mxu0 0
    %197 = vmatpush1.bf16.msra.mxu0 %v175
    %198 = vmatprep.subr.bf16.mxu0 0
    %199 = vmatpush1.bf16.msra.mxu0 %v174
    %200 = vmatprep.subr.bf16.mxu0 0
    %201 = vmatpush1.bf16.msra.mxu0 %v173
    %202 = vmatprep.subr.bf16.mxu0 0
    %203 = vmatpush1.bf16.msra.mxu0 %v172
    %204 = vmatprep.subr.bf16.mxu0 0
    %205 = vmatpush2.bf16.msra.mxu0 0
    %206 = vmatprep.subr.bf16.mxu0 0
    %207 = vmatpush2.bf16.msra.mxu0 0
    %208 = vmatprep.subr.bf16.mxu0 0
    %209 = vmatpush2.bf16.msra.mxu0 0
    %210 = vmatprep.subr.bf16.mxu0 0
    %211 = vmatpush2.bf16.msra.mxu0 0
    %212 = vmatprep.subr.bf16.mxu0 0
    %213 = vmatpush2.bf16.msra.mxu0 0
    %214 = vmatprep.subr.bf16.mxu0 0
    %215 = vmatpush2.bf16.msra.mxu0 0
    %216 = vmatprep.subr.bf16.mxu0 0
    %217 = vmatpush2.bf16.msra.mxu0 0
    %218 = vmatprep.subr.bf16.mxu0 0
    %219 = vmatpush2.bf16.msra.mxu0 0
    %220 = vmatprep.mubr.bf16.mxu0 0
    %221 = vmatmul.mubr.bf16.gmra.mxu0 %v138
    %v222 = vpop.f32.mrf.mxu0
    %v223 = vadd.f32 %v132, %v222
    %v224 = vpop.f32.mrf.mxu0
    %v225 = vpop.f32.mrf.mxu0
    %v226 = vadd.f32 %v132, %v225
    %v227 = vpop.f32.mrf.mxu0
    %228 = vdwg.mxu0
    %229 = vst [vmem:[#allocation10] sm:$0xff] %v223
    %230 = vst [vmem:[#allocation10 + $0x8] sm:$0xff] %v226
    // Predicated region
    $region34: #{tpu_custom_call.1} parent=1 // pred_check
      _
    $region35: #{tpu_custom_call.1} parent=1 // pred_check_branch
      %232 = sbr.rel (0) target = $region37
    $region36: #{tpu_custom_call.1} parent=1 // pred_region
      %s234 = ssub.s32 256, 256
      %235 = vsyncadd [#allocation7], %s234
      %s236 = sshll.u32 [#allocation10], 4
      %s237 = int_to_ptr.vmem [resolvable:$true] %s236
      %242 = dma.vmem_to_hbm [thread:$0]  %s237, 256, %s6, [#allocation7], 128, 128, 8
    $region37: #{tpu_custom_call.1} parent=1 // pred_fallthru
      _
    // Predicated region
    $region38: #{tpu_custom_call.1} parent=1 // pred_check
      _
    $region39: #{tpu_custom_call.1} parent=1 // pred_check_branch
      %244 = sbr.rel (0) target = $region41
    $region40: #{tpu_custom_call.1} parent=1 // pred_region
      %245 = dma.done [#allocation7], 256
    $region41: #{tpu_custom_call.1} parent=1 // pred_fallthru
      _
    %246 = vsyncpa [#allocation6], 1
    %247 = vsyncpa [#allocation9], 1
    %248 = vsyncpa [#allocation7], 1

</llo_original>
